<compile_context>
chip_gen: v7x
topology: tpu7x:2x2x1
jax: 0.10.0
libtpu: 0.0.40
codegen_flags: <defaults>
</compile_context>

<pallas_src>
import functools

import jax
import jax.numpy as jnp
from jax import lax
from jax.experimental import pallas as pl
from jax.experimental.pallas import tpu as pltpu


def _round_up(x, m):
    return ((x + m - 1) // m) * m


def _mlp_deeper_kernel(x_ref, w1_ref, b1_ref, w2_ref, b2_ref, w3_ref, b3_ref,
                       o_ref, *, layer_num):
    # Hoist biases (and W2) out of the mid-layer loop: JAX does not CSE
    # broadcast_in_dim, so re-reading them per iteration costs real vld/VALU.
    b1 = b1_ref[...]
    b2 = b2_ref[...]
    b3 = b3_ref[...]

    h = jnp.dot(x_ref[...], w1_ref[...],
                preferred_element_type=jnp.float32) + b1

    if layer_num > 0:
        w2 = w2_ref[...]

        def body(_, carry):
            return jnp.dot(carry, w2,
                           preferred_element_type=jnp.float32) + b2

        # fori_loop bounds the live range of `h` to a single tile; unroll only
        # small trip counts so the LLO scheduler sees the body.
        h = lax.fori_loop(0, layer_num, body, h, unroll=(layer_num <= 4))

    h = jnp.maximum(h, 0.0)  # ReLU
    o_ref[...] = (jnp.dot(h, w3_ref[...],
                          preferred_element_type=jnp.float32)
                  + b3).astype(o_ref.dtype)


def mlp_deeper_forward(x_nchw, params, *, multi_ratio=2, tm_max=512):
    """Runs MLP_Deeper forward. x_nchw: (N, C, H, W) float32."""
    n, c, h, w = x_nchw.shape
    dim_in = c * h * w
    x_flat = x_nchw.reshape(n, dim_in).astype(jnp.float32)

    w1, b1, w2, b2, w3, b3 = params
    dim_hidden = w1.shape[1]
    dim_out = w3.shape[1]
    layer_num = multi_ratio - 1

    # --- pad feature dims to 128 lanes (zero padding == mathematical no-op) ---
    di_p = _round_up(dim_in, 128)
    dh_p = _round_up(dim_hidden, 128)
    do_p = _round_up(dim_out, 128)

    # --- batch tile: lane-dense, sublane-aligned, sized for v7x VMEM ---
    tm = min(tm_max, _round_up(n, 8))
    n_pad = _round_up(n, tm)

    x_p = jnp.pad(x_flat, ((0, n_pad - n), (0, di_p - dim_in)))
    w1_p = jnp.pad(w1, ((0, di_p - dim_in), (0, dh_p - dim_hidden)))
    b1_p = jnp.pad(b1, ((0, 0), (0, dh_p - dim_hidden)))
    w2_p = jnp.pad(w2, ((0, dh_p - dim_hidden), (0, dh_p - dim_hidden)))
    b2_p = jnp.pad(b2, ((0, 0), (0, dh_p - dim_hidden)))
    w3_p = jnp.pad(w3, ((0, dh_p - dim_hidden), (0, do_p - dim_out)))
    b3_p = jnp.pad(b3, ((0, 0), (0, do_p - dim_out)))

    grid = (n_pad // tm,)
    kernel = functools.partial(_mlp_deeper_kernel, layer_num=layer_num)

    # Rough roofline hint for XLA's scheduler around the custom call.
    flops = 2 * n_pad * (di_p * dh_p + layer_num * dh_p * dh_p + dh_p * do_p)
    bytes_accessed = 4 * (n_pad * di_p + n_pad * do_p
                          + di_p * dh_p + dh_p * dh_p + dh_p * do_p
                          + 2 * dh_p + do_p)

    out_p = pl.pallas_call(
        kernel,
        out_shape=jax.ShapeDtypeStruct((n_pad, do_p), jnp.float32),
        grid_spec=pltpu.PrefetchScalarGridSpec(
            num_scalar_prefetch=0,
            grid=grid,
            in_specs=[
                # x: tiled over the batch grid axis.
                pl.BlockSpec((tm, di_p), lambda i: (i, 0)),
                # Weights / biases: constant index_map -> resident in VMEM.
                pl.BlockSpec((di_p, dh_p), lambda i: (0, 0)),
                pl.BlockSpec((1, dh_p), lambda i: (0, 0)),
                pl.BlockSpec((dh_p, dh_p), lambda i: (0, 0)),
                pl.BlockSpec((1, dh_p), lambda i: (0, 0)),
                pl.BlockSpec((dh_p, do_p), lambda i: (0, 0)),
                pl.BlockSpec((1, do_p), lambda i: (0, 0)),
            ],
            out_specs=pl.BlockSpec((tm, do_p), lambda i: (i, 0)),
        ),
        compiler_params=pltpu.CompilerParams(
            dimension_semantics=("parallel",),     # megacore sharding on v7x
            vmem_limit_bytes=32 * 1024 * 1024,     # safe on v5e/v6e/v7x
        ),
        cost_estimate=pl.CostEstimate(
            flops=flops, transcendentals=0, bytes_accessed=bytes_accessed),
    )(x_p, w1_p, b1_p, w2_p, b2_p, w3_p, b3_p)

    return out_p[:n, :dim_out]


def init_params(key, dim_in, dim_hidden, dim_out):
    """Deterministic init mimicking torch.nn.Linear default
    (U[-1/sqrt(fan_in), 1/sqrt(fan_in)]).  Weights stored (in, out)."""
    ks = jax.random.split(key, 6)

    def linear(kw, kb, fan_in, fan_out):
        bound = 1.0 / jnp.sqrt(jnp.float32(fan_in))
        w = jax.random.uniform(kw, (fan_in, fan_out), jnp.float32, -bound, bound)
        b = jax.random.uniform(kb, (1, fan_out), jnp.float32, -bound, bound)
        return w, b

    w1, b1 = linear(ks[0], ks[1], dim_in, dim_hidden)
    w2, b2 = linear(ks[2], ks[3], dim_hidden, dim_hidden)
    w3, b3 = linear(ks[4], ks[5], dim_hidden, dim_out)
    return (w1, b1, w2, b2, w3, b3)


def reference_forward(x_nchw, params, *, multi_ratio=2):
    """Plain-JAX reference for correctness checking."""
    n, c, h, w = x_nchw.shape
    x = x_nchw.reshape(n, c * h * w)
    w1, b1, w2, b2, w3, b3 = params
    x = x @ w1 + b1
    for _ in range(multi_ratio - 1):
        x = x @ w2 + b2
    x = jnp.maximum(x, 0.0)
    return x @ w3 + b3


if __name__ == "__main__":
    # Small shapes: batch=2, channels=4, spatial=16 -> dim_in = 4*16*16 = 1024
    batch, channels, spatial = 2, 4, 16
    dim_in = channels * spatial * spatial
    dim_hidden = 32
    dim_out = 10
    multi_ratio = 2

    key = jax.random.PRNGKey(0)
    kx, kp = jax.random.split(key)
    x = jax.random.normal(kx, (batch, channels, spatial, spatial), jnp.float32)
    params = init_params(kp, dim_in, dim_hidden, dim_out)

    out = mlp_deeper_forward(x, params, multi_ratio=multi_ratio)
    out = jax.block_until_ready(out)

    ref = reference_forward(x, params, multi_ratio=multi_ratio)
    assert out.shape == (batch, dim_out)
    assert jnp.allclose(out, ref, atol=1e-4, rtol=1e-4), "mismatch vs reference"

    print("KERNEL_OK")
</pallas_src>

<mosaic_0001>
module attributes {stable_mosaic.version = 11 : i64} {
  func.func @_mlp_deeper_kernel(%arg0: i32, %arg1: memref<8x1024xf32, #tpu.memory_space<vmem>>, %arg2: memref<1024x128xf32, #tpu.memory_space<vmem>>, %arg3: memref<1x128xf32, #tpu.memory_space<vmem>>, %arg4: memref<128x128xf32, #tpu.memory_space<vmem>>, %arg5: memref<1x128xf32, #tpu.memory_space<vmem>>, %arg6: memref<128x128xf32, #tpu.memory_space<vmem>>, %arg7: memref<1x128xf32, #tpu.memory_space<vmem>>, %arg8: memref<8x128xf32, #tpu.memory_space<vmem>>) attributes {dimension_semantics = [#tpu.dimension_semantics<parallel>], iteration_bounds = array<i64: 1>, scalar_prefetch = 0 : i64, scratch_operands = 0 : i64, tpu.core_type = #tpu.core_type<tc>, window_params = [{transform_indices = @transform_0, window_bounds = array<i64: 8, 1024>}, {pipeline_mode = #tpu.pipeline_mode<synchronous>, transform_indices = @transform_1, window_bounds = array<i64: 1024, 128>}, {pipeline_mode = #tpu.pipeline_mode<synchronous>, transform_indices = @transform_2, window_bounds = array<i64: 1, 128>}, {pipeline_mode = #tpu.pipeline_mode<synchronous>, transform_indices = @transform_3, window_bounds = array<i64: 128, 128>}, {pipeline_mode = #tpu.pipeline_mode<synchronous>, transform_indices = @transform_4, window_bounds = array<i64: 1, 128>}, {pipeline_mode = #tpu.pipeline_mode<synchronous>, transform_indices = @transform_5, window_bounds = array<i64: 128, 128>}, {pipeline_mode = #tpu.pipeline_mode<synchronous>, transform_indices = @transform_6, window_bounds = array<i64: 1, 128>}, {transform_indices = @transform_7, window_bounds = array<i64: 8, 128>}]} {
    %c0 = arith.constant 0 : index
    %c0_0 = arith.constant 0 : index
    %0 = vector.load %arg3[%c0, %c0_0] : memref<1x128xf32, #tpu.memory_space<vmem>>, vector<1x128xf32>
    %c0_1 = arith.constant 0 : index
    %c0_2 = arith.constant 0 : index
    %1 = vector.load %arg5[%c0_1, %c0_2] : memref<1x128xf32, #tpu.memory_space<vmem>>, vector<1x128xf32>
    %c0_3 = arith.constant 0 : index
    %c0_4 = arith.constant 0 : index
    %2 = vector.load %arg7[%c0_3, %c0_4] : memref<1x128xf32, #tpu.memory_space<vmem>>, vector<1x128xf32>
    %c0_5 = arith.constant 0 : index
    %c0_6 = arith.constant 0 : index
    %3 = vector.load %arg1[%c0_5, %c0_6] : memref<8x1024xf32, #tpu.memory_space<vmem>>, vector<8x1024xf32>
    %c0_7 = arith.constant 0 : index
    %c0_8 = arith.constant 0 : index
    %4 = vector.load %arg2[%c0_7, %c0_8] : memref<1024x128xf32, #tpu.memory_space<vmem>>, vector<1024x128xf32>
    %cst = arith.constant dense<0.000000e+00> : vector<8x128xf32>
    %5 = tpu.matmul %3, %4, %cst {dimension_numbers = #tpu.dot_dimension_numbers<[1], [0], [0], [1], [0, 0, 1, 1], [], []>} : vector<8x1024xf32>, vector<1024x128xf32>, vector<8x128xf32> -> vector<8x128xf32>
    %6 = vector.broadcast %0 : vector<1x128xf32> to vector<8x128xf32>
    %7 = arith.addf %5, %6 : vector<8x128xf32>
    %c0_9 = arith.constant 0 : index
    %c0_10 = arith.constant 0 : index
    %8 = vector.load %arg4[%c0_9, %c0_10] : memref<128x128xf32, #tpu.memory_space<vmem>>, vector<128x128xf32>
    %c0_i32 = arith.constant 0 : i32
    %cst_11 = arith.constant dense<0.000000e+00> : vector<8x128xf32>
    %9 = tpu.matmul %7, %8, %cst_11 {dimension_numbers = #tpu.dot_dimension_numbers<[1], [0], [0], [1], [0, 0, 1, 1], [], []>} : vector<8x128xf32>, vector<128x128xf32>, vector<8x128xf32> -> vector<8x128xf32>
    %10 = vector.broadcast %1 : vector<1x128xf32> to vector<8x128xf32>
    %11 = arith.addf %9, %10 : vector<8x128xf32>
    %cst_12 = arith.constant 0.000000e+00 : f32
    %12 = vector.broadcast %cst_12 : f32 to vector<8x128xf32>
    %13 = arith.maximumf %11, %12 : vector<8x128xf32>
    %c0_13 = arith.constant 0 : index
    %c0_14 = arith.constant 0 : index
    %14 = vector.load %arg6[%c0_13, %c0_14] : memref<128x128xf32, #tpu.memory_space<vmem>>, vector<128x128xf32>
    %cst_15 = arith.constant dense<0.000000e+00> : vector<8x128xf32>
    %15 = tpu.matmul %13, %14, %cst_15 {dimension_numbers = #tpu.dot_dimension_numbers<[1], [0], [0], [1], [0, 0, 1, 1], [], []>} : vector<8x128xf32>, vector<128x128xf32>, vector<8x128xf32> -> vector<8x128xf32>
    %16 = vector.broadcast %2 : vector<1x128xf32> to vector<8x128xf32>
    %17 = arith.addf %15, %16 : vector<8x128xf32>
    %c0_16 = arith.constant 0 : index
    %c0_17 = arith.constant 0 : index
    %18 = vector.load %arg8[%c0_16, %c0_17] : memref<8x128xf32, #tpu.memory_space<vmem>>, vector<8x128xf32>
    tpu.vector_store %arg8[%c0_16, %c0_17], %17 {strides = array<i32>} : memref<8x128xf32, #tpu.memory_space<vmem>>, vector<8x128xf32>,
    return
  }
  func.func @transform_0(%arg0: i32) -> (i32, i32) {
    %c0_i32 = arith.constant 0 : i32
    %c0_i32_0 = arith.constant 0 : i32
    return %arg0, %c0_i32 : i32, i32
  }
  func.func @transform_1(%arg0: i32) -> (i32, i32) {
    %c0_i32 = arith.constant 0 : i32
    %c0_i32_0 = arith.constant 0 : i32
    %c0_i32_1 = arith.constant 0 : i32
    return %c0_i32, %c0_i32_0 : i32, i32
  }
  func.func @transform_2(%arg0: i32) -> (i32, i32) {
    %c0_i32 = arith.constant 0 : i32
    %c0_i32_0 = arith.constant 0 : i32
    %c0_i32_1 = arith.constant 0 : i32
    return %c0_i32, %c0_i32_0 : i32, i32
  }
  func.func @transform_3(%arg0: i32) -> (i32, i32) {
    %c0_i32 = arith.constant 0 : i32
    %c0_i32_0 = arith.constant 0 : i32
    %c0_i32_1 = arith.constant 0 : i32
    return %c0_i32, %c0_i32_0 : i32, i32
  }
  func.func @transform_4(%arg0: i32) -> (i32, i32) {
    %c0_i32 = arith.constant 0 : i32
    %c0_i32_0 = arith.constant 0 : i32
    %c0_i32_1 = arith.constant 0 : i32
    return %c0_i32, %c0_i32_0 : i32, i32
  }
  func.func @transform_5(%arg0: i32) -> (i32, i32) {
    %c0_i32 = arith.constant 0 : i32
    %c0_i32_0 = arith.constant 0 : i32
    %c0_i32_1 = arith.constant 0 : i32
    return %c0_i32, %c0_i32_0 : i32, i32
  }
  func.func @transform_6(%arg0: i32) -> (i32, i32) {
    %c0_i32 = arith.constant 0 : i32
    %c0_i32_0 = arith.constant 0 : i32
    %c0_i32_1 = arith.constant 0 : i32
    return %c0_i32, %c0_i32_0 : i32, i32
  }
  func.func @transform_7(%arg0: i32) -> (i32, i32) {
    %c0_i32 = arith.constant 0 : i32
    %c0_i32_0 = arith.constant 0 : i32
    return %arg0, %c0_i32 : i32, i32
  }
}

</mosaic_0001>

<llo_original>
// kernel: tpu_custom_call.1
$region0: #{tpu_custom_call.1}
  #allocation0 [shape = 'u32[]', space=smem, size = 0x4, offset = 0x4, fixed_abs, tag = 'smem constant byte address 0x4 - core index']
  #allocation1 [shape = 'u32[144,128]{1,0:T(1,128)}', space=vmem, size = 0x12000, scoped, tag = 'internal scratch']
  %s0 = inlined_call_operand.hbm [shape: f32[8,1024], index: 0, kind: input, shape index: {}]
  %s1 = inlined_call_operand.hbm [shape: f32[1024,128], index: 1, kind: input, shape index: {}]
  %s2 = inlined_call_operand.vmem [shape: f32[1,128], index: 2, kind: input, shape index: {}]
  %s3 = inlined_call_operand.hbm [shape: f32[128,128], index: 3, kind: input, shape index: {}]
  %s4 = inlined_call_operand.vmem [shape: f32[1,128], index: 4, kind: input, shape index: {}]
  %s5 = inlined_call_operand.hbm [shape: f32[128,128], index: 5, kind: input, shape index: {}]
  %s6 = inlined_call_operand.vmem [shape: f32[1,128], index: 6, kind: input, shape index: {}]
  %s7 = inlined_call_operand.hbm [shape: f32[8,128], index: 7, kind: output, shape index: {}]
  %s8 = sld [smem:[#allocation0]]
  $region54: #{tpu_custom_call.1} parent=0
    _
  %s10 = ssub.s32 1, %s8
  %s11 = scalar_select 0, %s10, %s8
  $region1: #{tpu_custom_call.1} parent=0
    #allocation2 [shape = 'u8[32768]{0}', space=vmem, size = 0x8000, scoped, tag = 'input window, operand 0, single buffered']
    #allocation3 [shape = 's32[1]{0}', space=sflag, size = 0x4, scoped, tag = 'scoped memory for tpu_custom_call.1']
    #allocation4 [shape = 's32[1]{0}', space=sflag, size = 0x4, scoped, tag = 'scoped memory for tpu_custom_call.1']
    #allocation5 [shape = 'u8[524288]{0}', space=vmem, size = 0x80000, scoped, tag = 'input window, operand 1, single buffered']
    #allocation6 [shape = 's32[1]{0}', space=sflag, size = 0x4, scoped, tag = 'scoped memory for tpu_custom_call.1']
    #allocation7 [shape = 'u8[65536]{0}', space=vmem, size = 0x10000, scoped, tag = 'input window, operand 3, single buffered']
    #allocation8 [shape = 'u8[65536]{0}', space=vmem, size = 0x10000, scoped, tag = 'input window, operand 5, single buffered']
    #allocation9 [shape = 's32[1]{0}', space=sflag, size = 0x4, scoped, tag = 'scoped memory for tpu_custom_call.1']
    #allocation10 [shape = 'u8[4096]{0}', space=vmem, size = 0x1000, scoped, tag = 'output window, operand 0, single buffered']
    %12 = vsyncpa [#allocation3], 0
    %13 = vsyncpa [#allocation6], 0
    %14 = vsyncpa [#allocation9], 0
    %15 = vsyncpa [#allocation4], 0
    // Predicated region
    $region2: #{tpu_custom_call.1} parent=1 // pred_check
      _
    $region3: #{tpu_custom_call.1} parent=1 // pred_check_branch
      %17 = sbr.rel (0) target = $region5
    $region4: #{tpu_custom_call.1} parent=1 // pred_region
      %s19 = ssub.s32 1024, 1024
      %20 = vsyncadd [#allocation3], %s19
      %s22 = sshll.u32 [#allocation2], 4
      %s23 = int_to_ptr.vmem [resolvable:$true] %s22
      %25 = dma.hbm_to_vmem [thread:$0]  %s0, 1024, %s23, [#allocation3]
    $region5: #{tpu_custom_call.1} parent=1 // pred_fallthru
      _
    // Predicated region
    $region6: #{tpu_custom_call.1} parent=1 // pred_check
      _
    $region7: #{tpu_custom_call.1} parent=1 // pred_check_branch
      %27 = sbr.rel (0) target = $region9
    $region8: #{tpu_custom_call.1} parent=1 // pred_region
      %s29 = ssub.s32 16384, 16384
      %30 = vsyncadd [#allocation6], %s29
      %s31 = sshll.u32 [#allocation5], 4
      %s32 = int_to_ptr.vmem [resolvable:$true] %s31
      %37 = dma.hbm_to_vmem [thread:$0]  %s1, 16384, %s32, [#allocation6], 128, 128, 8
    $region9: #{tpu_custom_call.1} parent=1 // pred_fallthru
      _
    // Predicated region
    $region10: #{tpu_custom_call.1} parent=1 // pred_check
      _
    $region11: #{tpu_custom_call.1} parent=1 // pred_check_branch
      %39 = sbr.rel (0) target = $region13
    $region12: #{tpu_custom_call.1} parent=1 // pred_region
      _
    $region13: #{tpu_custom_call.1} parent=1 // pred_fallthru
      _
    // Predicated region
    $region14: #{tpu_custom_call.1} parent=1 // pred_check
      _
    $region15: #{tpu_custom_call.1} parent=1 // pred_check_branch
      %41 = sbr.rel (0) target = $region17
    $region16: #{tpu_custom_call.1} parent=1 // pred_region
      %s43 = ssub.s32 2048, 2048
      %44 = vsyncadd [#allocation6], %s43
      %s45 = sshll.u32 [#allocation7], 4
      %s46 = int_to_ptr.vmem [resolvable:$true] %s45
      %51 = dma.hbm_to_vmem [thread:$0]  %s3, 2048, %s46, [#allocation6], 128, 128, 8
    $region17: #{tpu_custom_call.1} parent=1 // pred_fallthru
      _
    // Predicated region
    $region18: #{tpu_custom_call.1} parent=1 // pred_check
      _
    $region19: #{tpu_custom_call.1} parent=1 // pred_check_branch
      %53 = sbr.rel (0) target = $region21
    $region20: #{tpu_custom_call.1} parent=1 // pred_region
      _
    $region21: #{tpu_custom_call.1} parent=1 // pred_fallthru
      _
    // Predicated region
    $region22: #{tpu_custom_call.1} parent=1 // pred_check
      _
    $region23: #{tpu_custom_call.1} parent=1 // pred_check_branch
      %55 = sbr.rel (0) target = $region25
    $region24: #{tpu_custom_call.1} parent=1 // pred_region
      %s57 = ssub.s32 2048, 2048
      %58 = vsyncadd [#allocation9], %s57
      %s59 = sshll.u32 [#allocation8], 4
      %s60 = int_to_ptr.vmem [resolvable:$true] %s59
      %65 = dma.hbm_to_vmem [thread:$0]  %s5, 2048, %s60, [#allocation9], 128, 128, 8
    $region25: #{tpu_custom_call.1} parent=1 // pred_fallthru
      _
    // Predicated region
    $region26: #{tpu_custom_call.1} parent=1 // pred_check
      _
    $region27: #{tpu_custom_call.1} parent=1 // pred_check_branch
      %67 = sbr.rel (0) target = $region29
    $region28: #{tpu_custom_call.1} parent=1 // pred_region
      _
    $region29: #{tpu_custom_call.1} parent=1 // pred_fallthru
      _
    // Predicated region
    $region30: #{tpu_custom_call.1} parent=1 // pred_check
      _
    $region31: #{tpu_custom_call.1} parent=1 // pred_check_branch
      %69 = sbr.rel (0) target = $region33
    $region32: #{tpu_custom_call.1} parent=1 // pred_region
      %70 = dma.done [#allocation3], 1024
    $region33: #{tpu_custom_call.1} parent=1 // pred_fallthru
      _
    // Predicated region
    $region34: #{tpu_custom_call.1} parent=1 // pred_check
      _
    $region35: #{tpu_custom_call.1} parent=1 // pred_check_branch
      %72 = sbr.rel (0) target = $region37
    $region36: #{tpu_custom_call.1} parent=1 // pred_region
      %73 = dma.done [#allocation6], 16384
    $region37: #{tpu_custom_call.1} parent=1 // pred_fallthru
      _
    // Predicated region
    $region38: #{tpu_custom_call.1} parent=1 // pred_check
      _
    $region39: #{tpu_custom_call.1} parent=1 // pred_check_branch
      %75 = sbr.rel (0) target = $region41
    $region40: #{tpu_custom_call.1} parent=1 // pred_region
      %76 = dma.done [#allocation6], 2048
    $region41: #{tpu_custom_call.1} parent=1 // pred_fallthru
      _
    // Predicated region
    $region42: #{tpu_custom_call.1} parent=1 // pred_check
      _
    $region43: #{tpu_custom_call.1} parent=1 // pred_check_branch
      %78 = sbr.rel (0) target = $region45
    $region44: #{tpu_custom_call.1} parent=1 // pred_region
      %79 = dma.done [#allocation9], 2048
    $region45: #{tpu_custom_call.1} parent=1 // pred_fallthru
      _
    %v80 = vld [vmem:[%s2] sm:$0x1]
    %v81 = vld [vmem:[%s4] sm:$0x1]
    %v82 = vld [vmem:[%s6] sm:$0x1]
    %v83 = vld [vmem:[#allocation2] sm:$0xff]
    %v84 = vld [vmem:[#allocation2 + $0x8] sm:$0xff]
    %v85 = vld [vmem:[#allocation2 + $0x10] sm:$0xff]
    %v86 = vld [vmem:[#allocation2 + $0x18] sm:$0xff]
    %v87 = vld [vmem:[#allocation2 + $0x20] sm:$0xff]
    %v88 = vld [vmem:[#allocation2 + $0x28] sm:$0xff]
    %v89 = vld [vmem:[#allocation2 + $0x30] sm:$0xff]
    %v90 = vld [vmem:[#allocation2 + $0x38] sm:$0xff]
    %v91 = vld [vmem:[#allocation5] sm:$0xff]
    %v92 = vld [vmem:[#allocation5 + $0x8] sm:$0xff]
    %v93 = vld [vmem:[#allocation5 + $0x10] sm:$0xff]
    %v94 = vld [vmem:[#allocation5 + $0x18] sm:$0xff]
    %v95 = vld [vmem:[#allocation5 + $0x20] sm:$0xff]
    %v96 = vld [vmem:[#allocation5 + $0x28] sm:$0xff]
    %v97 = vld [vmem:[#allocation5 + $0x30] sm:$0xff]
    %v98 = vld [vmem:[#allocation5 + $0x38] sm:$0xff]
    %v99 = vld [vmem:[#allocation5 + $0x40] sm:$0xff]
    %v100 = vld [vmem:[#allocation5 + $0x48] sm:$0xff]
    %v101 = vld [vmem:[#allocation5 + $0x50] sm:$0xff]
    %v102 = vld [vmem:[#allocation5 + $0x58] sm:$0xff]
    %v103 = vld [vmem:[#allocation5 + $0x60] sm:$0xff]
    %v104 = vld [vmem:[#allocation5 + $0x68] sm:$0xff]
    %v105 = vld [vmem:[#allocation5 + $0x70] sm:$0xff]
    %v106 = vld [vmem:[#allocation5 + $0x78] sm:$0xff]
    %v107 = vld [vmem:[#allocation5 + $0x80] sm:$0xff]
    %v108 = vld [vmem:[#allocation5 + $0x88] sm:$0xff]
    %v109 = vld [vmem:[#allocation5 + $0x90] sm:$0xff]
    %v110 = vld [vmem:[#allocation5 + $0x98] sm:$0xff]
    %v111 = vld [vmem:[#allocation5 + $0xa0] sm:$0xff]
    %v112 = vld [vmem:[#allocation5 + $0xa8] sm:$0xff]
    %v113 = vld [vmem:[#allocation5 + $0xb0] sm:$0xff]
    %v114 = vld [vmem:[#allocation5 + $0xb8] sm:$0xff]
    %v115 = vld [vmem:[#allocation5 + $0xc0] sm:$0xff]
    %v116 = vld [vmem:[#allocation5 + $0xc8] sm:$0xff]
    %v117 = vld [vmem:[#allocation5 + $0xd0] sm:$0xff]
    %v118 = vld [vmem:[#allocation5 + $0xd8] sm:$0xff]
    %v119 = vld [vmem:[#allocation5 + $0xe0] sm:$0xff]
    %v120 = vld [vmem:[#allocation5 + $0xe8] sm:$0xff]
    %v121 = vld [vmem:[#allocation5 + $0xf0] sm:$0xff]
    %v122 = vld [vmem:[#allocation5 + $0xf8] sm:$0xff]
    %v123 = vld [vmem:[#allocation5 + $0x100] sm:$0xff]
    %v124 = vld [vmem:[#allocation5 + $0x108] sm:$0xff]
    %v125 = vld [vmem:[#allocation5 + $0x110] sm:$0xff]
    %v126 = vld [vmem:[#allocation5 + $0x118] sm:$0xff]
    %v127 = vld [vmem:[#allocation5 + $0x120] sm:$0xff]
    %v128 = vld [vmem:[#allocation5 + $0x128] sm:$0xff]
    %v129 = vld [vmem:[#allocation5 + $0x130] sm:$0xff]
    %v130 = vld [vmem:[#allocation5 + $0x138] sm:$0xff]
    %v131 = vld [vmem:[#allocation5 + $0x140] sm:$0xff]
    %v132 = vld [vmem:[#allocation5 + $0x148] sm:$0xff]
    %v133 = vld [vmem:[#allocation5 + $0x150] sm:$0xff]
    %v134 = vld [vmem:[#allocation5 + $0x158] sm:$0xff]
    %v135 = vld [vmem:[#allocation5 + $0x160] sm:$0xff]
    %v136 = vld [vmem:[#allocation5 + $0x168] sm:$0xff]
    %v137 = vld [vmem:[#allocation5 + $0x170] sm:$0xff]
    %v138 = vld [vmem:[#allocation5 + $0x178] sm:$0xff]
    %v139 = vld [vmem:[#allocation5 + $0x180] sm:$0xff]
    %v140 = vld [vmem:[#allocation5 + $0x188] sm:$0xff]
    %v141 = vld [vmem:[#allocation5 + $0x190] sm:$0xff]
    %v142 = vld [vmem:[#allocation5 + $0x198] sm:$0xff]
    %v143 = vld [vmem:[#allocation5 + $0x1a0] sm:$0xff]
    %v144 = vld [vmem:[#allocation5 + $0x1a8] sm:$0xff]
    %v145 = vld [vmem:[#allocation5 + $0x1b0] sm:$0xff]
    %v146 = vld [vmem:[#allocation5 + $0x1b8] sm:$0xff]
    %v147 = vld [vmem:[#allocation5 + $0x1c0] sm:$0xff]
    %v148 = vld [vmem:[#allocation5 + $0x1c8] sm:$0xff]
    %v149 = vld [vmem:[#allocation5 + $0x1d0] sm:$0xff]
    %v150 = vld [vmem:[#allocation5 + $0x1d8] sm:$0xff]
    %v151 = vld [vmem:[#allocation5 + $0x1e0] sm:$0xff]
    %v152 = vld [vmem:[#allocation5 + $0x1e8] sm:$0xff]
    %v153 = vld [vmem:[#allocation5 + $0x1f0] sm:$0xff]
    %v154 = vld [vmem:[#allocation5 + $0x1f8] sm:$0xff]
    %v155 = vld [vmem:[#allocation5 + $0x200] sm:$0xff]
    %v156 = vld [vmem:[#allocation5 + $0x208] sm:$0xff]
    %v157 = vld [vmem:[#allocation5 + $0x210] sm:$0xff]
    %v158 = vld [vmem:[#allocation5 + $0x218] sm:$0xff]
    %v159 = vld [vmem:[#allocation5 + $0x220] sm:$0xff]
    %v160 = vld [vmem:[#allocation5 + $0x228] sm:$0xff]
    %v161 = vld [vmem:[#allocation5 + $0x230] sm:$0xff]
    %v162 = vld [vmem:[#allocation5 + $0x238] sm:$0xff]
    %v163 = vld [vmem:[#allocation5 + $0x240] sm:$0xff]
    %v164 = vld [vmem:[#allocation5 + $0x248] sm:$0xff]
    %v165 = vld [vmem:[#allocation5 + $0x250] sm:$0xff]
    %v166 = vld [vmem:[#allocation5 + $0x258] sm:$0xff]
    %v167 = vld [vmem:[#allocation5 + $0x260] sm:$0xff]
    %v168 = vld [vmem:[#allocation5 + $0x268] sm:$0xff]
    %v169 = vld [vmem:[#allocation5 + $0x270] sm:$0xff]
    %v170 = vld [vmem:[#allocation5 + $0x278] sm:$0xff]
    %v171 = vld [vmem:[#allocation5 + $0x280] sm:$0xff]
    %v172 = vld [vmem:[#allocation5 + $0x288] sm:$0xff]
    %v173 = vld [vmem:[#allocation5 + $0x290] sm:$0xff]
    %v174 = vld [vmem:[#allocation5 + $0x298] sm:$0xff]
    %v175 = vld [vmem:[#allocation5 + $0x2a0] sm:$0xff]
    %v176 = vld [vmem:[#allocation5 + $0x2a8] sm:$0xff]
    %v177 = vld [vmem:[#allocation5 + $0x2b0] sm:$0xff]
    %v178 = vld [vmem:[#allocation5 + $0x2b8] sm:$0xff]
    %v179 = vld [vmem:[#allocation5 + $0x2c0] sm:$0xff]
    %v180 = vld [vmem:[#allocation5 + $0x2c8] sm:$0xff]
    %v181 = vld [vmem:[#allocation5 + $0x2d0] sm:$0xff]
    %v182 = vld [vmem:[#allocation5 + $0x2d8] sm:$0xff]
    %v183 = vld [vmem:[#allocation5 + $0x2e0] sm:$0xff]
    %v184 = vld [vmem:[#allocation5 + $0x2e8] sm:$0xff]
    %v185 = vld [vmem:[#allocation5 + $0x2f0] sm:$0xff]
    %v186 = vld [vmem:[#allocation5 + $0x2f8] sm:$0xff]
    %v187 = vld [vmem:[#allocation5 + $0x300] sm:$0xff]
    %v188 = vld [vmem:[#allocation5 + $0x308] sm:$0xff]
    %v189 = vld [vmem:[#allocation5 + $0x310] sm:$0xff]
    %v190 = vld [vmem:[#allocation5 + $0x318] sm:$0xff]
    %v191 = vld [vmem:[#allocation5 + $0x320] sm:$0xff]
    %v192 = vld [vmem:[#allocation5 + $0x328] sm:$0xff]
    %v193 = vld [vmem:[#allocation5 + $0x330] sm:$0xff]
    %v194 = vld [vmem:[#allocation5 + $0x338] sm:$0xff]
    %v195 = vld [vmem:[#allocation5 + $0x340] sm:$0xff]
    %v196 = vld [vmem:[#allocation5 + $0x348] sm:$0xff]
    %v197 = vld [vmem:[#allocation5 + $0x350] sm:$0xff]
    %v198 = vld [vmem:[#allocation5 + $0x358] sm:$0xff]
    %v199 = vld [vmem:[#allocation5 + $0x360] sm:$0xff]
    %v200 = vld [vmem:[#allocation5 + $0x368] sm:$0xff]
    %v201 = vld [vmem:[#allocation5 + $0x370] sm:$0xff]
    %v202 = vld [vmem:[#allocation5 + $0x378] sm:$0xff]
    %v203 = vld [vmem:[#allocation5 + $0x380] sm:$0xff]
    %v204 = vld [vmem:[#allocation5 + $0x388] sm:$0xff]
    %v205 = vld [vmem:[#allocation5 + $0x390] sm:$0xff]
    %v206 = vld [vmem:[#allocation5 + $0x398] sm:$0xff]
    %v207 = vld [vmem:[#allocation5 + $0x3a0] sm:$0xff]
    %v208 = vld [vmem:[#allocation5 + $0x3a8] sm:$0xff]
    %v209 = vld [vmem:[#allocation5 + $0x3b0] sm:$0xff]
    %v210 = vld [vmem:[#allocation5 + $0x3b8] sm:$0xff]
    %v211 = vld [vmem:[#allocation5 + $0x3c0] sm:$0xff]
    %v212 = vld [vmem:[#allocation5 + $0x3c8] sm:$0xff]
    %v213 = vld [vmem:[#allocation5 + $0x3d0] sm:$0xff]
    %v214 = vld [vmem:[#allocation5 + $0x3d8] sm:$0xff]
    %v215 = vld [vmem:[#allocation5 + $0x3e0] sm:$0xff]
    %v216 = vld [vmem:[#allocation5 + $0x3e8] sm:$0xff]
    %v217 = vld [vmem:[#allocation5 + $0x3f0] sm:$0xff]
    %v218 = vld [vmem:[#allocation5 + $0x3f8] sm:$0xff]
    %v220 = vlaneseq
    %v221 = vshrl.u32 %v220, 7
    %v222 = vsub.s32 0, %v221
    %v223 = vrot.slane %v80, %v222
    %225 = vmatprep.subr.mxu0 0.0
    %226 = vmatpush1.msra.mxu0 %v91
    %227 = vmatprep.subr.mxu0 0.0
    %228 = vmatpush1.msra.mxu0 %v92
    %229 = vmatprep.subr.mxu0 0.0
    %230 = vmatpush1.msra.mxu0 %v93
    %231 = vmatprep.subr.mxu0 0.0
    %232 = vmatpush1.msra.mxu0 %v94
    %233 = vmatprep.subr.mxu0 0.0
    %234 = vmatpush1.msra.mxu0 %v95
    %235 = vmatprep.subr.mxu0 0.0
    %236 = vmatpush1.msra.mxu0 %v96
    %237 = vmatprep.subr.mxu0 0.0
    %238 = vmatpush1.msra.mxu0 %v97
    %239 = vmatprep.subr.mxu0 0.0
    %240 = vmatpush1.msra.mxu0 %v98
    %241 = vmatprep.subr.mxu0 0.0
    %242 = vmatpush1.msra.mxu0 %v99
    %243 = vmatprep.subr.mxu0 0.0
    %244 = vmatpush1.msra.mxu0 %v100
    %245 = vmatprep.subr.mxu0 0.0
    %246 = vmatpush1.msra.mxu0 %v101
    %247 = vmatprep.subr.mxu0 0.0
    %248 = vmatpush1.msra.mxu0 %v102
    %249 = vmatprep.subr.mxu0 0.0
    %250 = vmatpush1.msra.mxu0 %v103
    %251 = vmatprep.subr.mxu0 0.0
    %252 = vmatpush1.msra.mxu0 %v104
    %253 = vmatprep.subr.mxu0 0.0
    %254 = vmatpush1.msra.mxu0 %v105
    %255 = vmatprep.subr.mxu0 0.0
    %256 = vmatpush1.msra.mxu0 %v106
    %257 = vmatprep.subr.mxu0 0.0
    %258 = vmatpush1.msra.mxu0 %v107
    %259 = vmatprep.subr.mxu0 0.0
    %260 = vmatpush1.msra.mxu0 %v108
    %261 = vmatprep.subr.mxu0 0.0
    %262 = vmatpush1.msra.mxu0 %v109
    %263 = vmatprep.subr.mxu0 0.0
    %264 = vmatpush1.msra.mxu0 %v110
    %265 = vmatprep.subr.mxu0 0.0
    %266 = vmatpush1.msra.mxu0 %v111
    %267 = vmatprep.subr.mxu0 0.0
    %268 = vmatpush1.msra.mxu0 %v112
    %269 = vmatprep.subr.mxu0 0.0
    %270 = vmatpush1.msra.mxu0 %v113
    %271 = vmatprep.subr.mxu0 0.0
    %272 = vmatpush1.msra.mxu0 %v114
    %273 = vmatprep.subr.mxu0 0.0
    %274 = vmatpush1.msra.mxu0 %v115
    %275 = vmatprep.subr.mxu0 0.0
    %276 = vmatpush1.msra.mxu0 %v116
    %277 = vmatprep.subr.mxu0 0.0
    %278 = vmatpush1.msra.mxu0 %v117
    %279 = vmatprep.subr.mxu0 0.0
    %280 = vmatpush1.msra.mxu0 %v118
    %281 = vmatprep.subr.mxu0 0.0
    %282 = vmatpush1.msra.mxu0 %v119
    %283 = vmatprep.subr.mxu0 0.0
    %284 = vmatpush1.msra.mxu0 %v120
    %285 = vmatprep.subr.mxu0 0.0
    %286 = vmatpush1.msra.mxu0 %v121
    %287 = vmatprep.subr.mxu0 0.0
    %288 = vmatpush1.msra.mxu0 %v122
    %289 = vmatprep.mubr.f32.mxu0 %v84
    %290 = vmatmul.mubr.f32.gmra.mrb[0].mxu0 %v83
    %v291 = vpop.f32.mrb[0].mxu0
    %v292 = vadd.f32 %v223, %v291
    %v293 = vpop.f32.mrb[0].mxu0
    %294 = vdwg.mxu0
    %295 = vmatprep.subr.mxu0 0.0
    %296 = vmatpush1.msra.mxu0 %v123
    %297 = vmatprep.subr.mxu0 0.0
    %298 = vmatpush1.msra.mxu0 %v124
    %299 = vmatprep.subr.mxu0 0.0
    %300 = vmatpush1.msra.mxu0 %v125
    %301 = vmatprep.subr.mxu0 0.0
    %302 = vmatpush1.msra.mxu0 %v126
    %303 = vmatprep.subr.mxu0 0.0
    %304 = vmatpush1.msra.mxu0 %v127
    %305 = vmatprep.subr.mxu0 0.0
    %306 = vmatpush1.msra.mxu0 %v128
    %307 = vmatprep.subr.mxu0 0.0
    %308 = vmatpush1.msra.mxu0 %v129
    %309 = vmatprep.subr.mxu0 0.0
    %310 = vmatpush1.msra.mxu0 %v130
    %311 = vmatprep.subr.mxu0 0.0
    %312 = vmatpush1.msra.mxu0 %v131
    %313 = vmatprep.subr.mxu0 0.0
    %314 = vmatpush1.msra.mxu0 %v132
    %315 = vmatprep.subr.mxu0 0.0
    %316 = vmatpush1.msra.mxu0 %v133
    %317 = vmatprep.subr.mxu0 0.0
    %318 = vmatpush1.msra.mxu0 %v134
    %319 = vmatprep.subr.mxu0 0.0
    %320 = vmatpush1.msra.mxu0 %v135
    %321 = vmatprep.subr.mxu0 0.0
    %322 = vmatpush1.msra.mxu0 %v136
    %323 = vmatprep.subr.mxu0 0.0
    %324 = vmatpush1.msra.mxu0 %v137
    %325 = vmatprep.subr.mxu0 0.0
    %326 = vmatpush1.msra.mxu0 %v138
    %327 = vmatprep.subr.mxu0 0.0
    %328 = vmatpush1.msra.mxu0 %v139
    %329 = vmatprep.subr.mxu0 0.0
    %330 = vmatpush1.msra.mxu0 %v140
    %331 = vmatprep.subr.mxu0 0.0
    %332 = vmatpush1.msra.mxu0 %v141
    %333 = vmatprep.subr.mxu0 0.0
    %334 = vmatpush1.msra.mxu0 %v142
    %335 = vmatprep.subr.mxu0 0.0
    %336 = vmatpush1.msra.mxu0 %v143
    %337 = vmatprep.subr.mxu0 0.0
    %338 = vmatpush1.msra.mxu0 %v144
    %339 = vmatprep.subr.mxu0 0.0
    %340 = vmatpush1.msra.mxu0 %v145
    %341 = vmatprep.subr.mxu0 0.0
    %342 = vmatpush1.msra.mxu0 %v146
    %343 = vmatprep.subr.mxu0 0.0
    %344 = vmatpush1.msra.mxu0 %v147
    %345 = vmatprep.subr.mxu0 0.0
    %346 = vmatpush1.msra.mxu0 %v148
    %347 = vmatprep.subr.mxu0 0.0
    %348 = vmatpush1.msra.mxu0 %v149
    %349 = vmatprep.subr.mxu0 0.0
    %350 = vmatpush1.msra.mxu0 %v150
    %351 = vmatprep.subr.mxu0 0.0
    %352 = vmatpush1.msra.mxu0 %v151
    %353 = vmatprep.subr.mxu0 0.0
    %354 = vmatpush1.msra.mxu0 %v152
    %355 = vmatprep.subr.mxu0 0.0
    %356 = vmatpush1.msra.mxu0 %v153
    %357 = vmatprep.subr.mxu0 0.0
    %358 = vmatpush1.msra.mxu0 %v154
    %359 = vmatprep.mubr.f32.mxu0 %v86
    %360 = vmatmul.mubr.f32.gmra.mrb[0].mxu0 %v85
    %v361 = vpop.f32.mrb[0].mxu0
    %v362 = vadd.f32 %v292, %v361
    %v363 = vpop.f32.mrb[0].mxu0
    %364 = vdwg.mxu0
    %365 = vmatprep.subr.mxu0 0.0
    %366 = vmatpush1.msra.mxu0 %v155
    %367 = vmatprep.subr.mxu0 0.0
    %368 = vmatpush1.msra.mxu0 %v156
    %369 = vmatprep.subr.mxu0 0.0
    %370 = vmatpush1.msra.mxu0 %v157
    %371 = vmatprep.subr.mxu0 0.0
    %372 = vmatpush1.msra.mxu0 %v158
    %373 = vmatprep.subr.mxu0 0.0
    %374 = vmatpush1.msra.mxu0 %v159
    %375 = vmatprep.subr.mxu0 0.0
    %376 = vmatpush1.msra.mxu0 %v160
    %377 = vmatprep.subr.mxu0 0.0
    %378 = vmatpush1.msra.mxu0 %v161
    %379 = vmatprep.subr.mxu0 0.0
    %380 = vmatpush1.msra.mxu0 %v162
    %381 = vmatprep.subr.mxu0 0.0
    %382 = vmatpush1.msra.mxu0 %v163
    %383 = vmatprep.subr.mxu0 0.0
    %384 = vmatpush1.msra.mxu0 %v164
    %385 = vmatprep.subr.mxu0 0.0
    %386 = vmatpush1.msra.mxu0 %v165
    %387 = vmatprep.subr.mxu0 0.0
    %388 = vmatpush1.msra.mxu0 %v166
    %389 = vmatprep.subr.mxu0 0.0
    %390 = vmatpush1.msra.mxu0 %v167
    %391 = vmatprep.subr.mxu0 0.0
    %392 = vmatpush1.msra.mxu0 %v168
    %393 = vmatprep.subr.mxu0 0.0
    %394 = vmatpush1.msra.mxu0 %v169
    %395 = vmatprep.subr.mxu0 0.0
    %396 = vmatpush1.msra.mxu0 %v170
    %397 = vmatprep.subr.mxu0 0.0
    %398 = vmatpush1.msra.mxu0 %v171
    %399 = vmatprep.subr.mxu0 0.0
    %400 = vmatpush1.msra.mxu0 %v172
    %401 = vmatprep.subr.mxu0 0.0
    %402 = vmatpush1.msra.mxu0 %v173
    %403 = vmatprep.subr.mxu0 0.0
    %404 = vmatpush1.msra.mxu0 %v174
    %405 = vmatprep.subr.mxu0 0.0
    %406 = vmatpush1.msra.mxu0 %v175
    %407 = vmatprep.subr.mxu0 0.0
    %408 = vmatpush1.msra.mxu0 %v176
    %409 = vmatprep.subr.mxu0 0.0
    %410 = vmatpush1.msra.mxu0 %v177
    %411 = vmatprep.subr.mxu0 0.0
    %412 = vmatpush1.msra.mxu0 %v178
    %413 = vmatprep.subr.mxu0 0.0
    %414 = vmatpush1.msra.mxu0 %v179
    %415 = vmatprep.subr.mxu0 0.0
    %416 = vmatpush1.msra.mxu0 %v180
    %417 = vmatprep.subr.mxu0 0.0
    %418 = vmatpush1.msra.mxu0 %v181
    %419 = vmatprep.subr.mxu0 0.0
    %420 = vmatpush1.msra.mxu0 %v182
    %421 = vmatprep.subr.mxu0 0.0
    %422 = vmatpush1.msra.mxu0 %v183
    %423 = vmatprep.subr.mxu0 0.0
    %424 = vmatpush1.msra.mxu0 %v184
    %425 = vmatprep.subr.mxu0 0.0
    %426 = vmatpush1.msra.mxu0 %v185
    %427 = vmatprep.subr.mxu0 0.0
    %428 = vmatpush1.msra.mxu0 %v186
    %429 = vmatprep.mubr.f32.mxu0 %v88
    %430 = vmatmul.mubr.f32.gmra.mrb[0].mxu0 %v87
    %v431 = vpop.f32.mrb[0].mxu0
    %v432 = vadd.f32 %v362, %v431
    %v433 = vpop.f32.mrb[0].mxu0
    %434 = vdwg.mxu0
    %435 = vmatprep.subr.mxu0 0.0
    %436 = vmatpush1.msra.mxu0 %v187
    %437 = vmatprep.subr.mxu0 0.0
    %438 = vmatpush1.msra.mxu0 %v188
    %439 = vmatprep.subr.mxu0 0.0
    %440 = vmatpush1.msra.mxu0 %v189
    %441 = vmatprep.subr.mxu0 0.0
    %442 = vmatpush1.msra.mxu0 %v190
    %443 = vmatprep.subr.mxu0 0.0
    %444 = vmatpush1.msra.mxu0 %v191
    %445 = vmatprep.subr.mxu0 0.0
    %446 = vmatpush1.msra.mxu0 %v192
    %447 = vmatprep.subr.mxu0 0.0
    %448 = vmatpush1.msra.mxu0 %v193
    %449 = vmatprep.subr.mxu0 0.0
    %450 = vmatpush1.msra.mxu0 %v194
    %451 = vmatprep.subr.mxu0 0.0
    %452 = vmatpush1.msra.mxu0 %v195
    %453 = vmatprep.subr.mxu0 0.0
    %454 = vmatpush1.msra.mxu0 %v196
    %455 = vmatprep.subr.mxu0 0.0
    %456 = vmatpush1.msra.mxu0 %v197
    %457 = vmatprep.subr.mxu0 0.0
    %458 = vmatpush1.msra.mxu0 %v198
    %459 = vmatprep.subr.mxu0 0.0
    %460 = vmatpush1.msra.mxu0 %v199
    %461 = vmatprep.subr.mxu0 0.0
    %462 = vmatpush1.msra.mxu0 %v200
    %463 = vmatprep.subr.mxu0 0.0
    %464 = vmatpush1.msra.mxu0 %v201
    %465 = vmatprep.subr.mxu0 0.0
    %466 = vmatpush1.msra.mxu0 %v202
    %467 = vmatprep.subr.mxu0 0.0
    %468 = vmatpush1.msra.mxu0 %v203
    %469 = vmatprep.subr.mxu0 0.0
    %470 = vmatpush1.msra.mxu0 %v204
    %471 = vmatprep.subr.mxu0 0.0
    %472 = vmatpush1.msra.mxu0 %v205
    %473 = vmatprep.subr.mxu0 0.0
    %474 = vmatpush1.msra.mxu0 %v206
    %475 = vmatprep.subr.mxu0 0.0
    %476 = vmatpush1.msra.mxu0 %v207
    %477 = vmatprep.subr.mxu0 0.0
    %478 = vmatpush1.msra.mxu0 %v208
    %479 = vmatprep.subr.mxu0 0.0
    %480 = vmatpush1.msra.mxu0 %v209
    %481 = vmatprep.subr.mxu0 0.0
    %482 = vmatpush1.msra.mxu0 %v210
    %483 = vmatprep.subr.mxu0 0.0
    %484 = vmatpush1.msra.mxu0 %v211
    %485 = vmatprep.subr.mxu0 0.0
    %486 = vmatpush1.msra.mxu0 %v212
    %487 = vmatprep.subr.mxu0 0.0
    %488 = vmatpush1.msra.mxu0 %v213
    %489 = vmatprep.subr.mxu0 0.0
    %490 = vmatpush1.msra.mxu0 %v214
    %491 = vmatprep.subr.mxu0 0.0
    %492 = vmatpush1.msra.mxu0 %v215
    %493 = vmatprep.subr.mxu0 0.0
    %494 = vmatpush1.msra.mxu0 %v216
    %495 = vmatprep.subr.mxu0 0.0
    %496 = vmatpush1.msra.mxu0 %v217
    %497 = vmatprep.subr.mxu0 0.0
    %498 = vmatpush1.msra.mxu0 %v218
    %499 = vmatprep.mubr.f32.mxu0 %v90
    %500 = vmatmul.mubr.f32.gmra.mrb[0].mxu0 %v89
    %v501 = vpop.f32.mrb[0].mxu0
    %v502 = vadd.f32 %v432, %v501
    %v503 = vpop.f32.mrb[0].mxu0
    %504 = vdwg.mxu0
    %v505 = vld [vmem:[#allocation7] sm:$0xff]
    %v506 = vld [vmem:[#allocation7 + $0x8] sm:$0xff]
    %v507 = vld [vmem:[#allocation7 + $0x10] sm:$0xff]
    %v508 = vld [vmem:[#allocation7 + $0x18] sm:$0xff]
    %v509 = vld [vmem:[#allocation7 + $0x20] sm:$0xff]
    %v510 = vld [vmem:[#allocation7 + $0x28] sm:$0xff]
    %v511 = vld [vmem:[#allocation7 + $0x30] sm:$0xff]
    %v512 = vld [vmem:[#allocation7 + $0x38] sm:$0xff]
    %v513 = vld [vmem:[#allocation7 + $0x40] sm:$0xff]
    %v514 = vld [vmem:[#allocation7 + $0x48] sm:$0xff]
    %v515 = vld [vmem:[#allocation7 + $0x50] sm:$0xff]
    %v516 = vld [vmem:[#allocation7 + $0x58] sm:$0xff]
    %v517 = vld [vmem:[#allocation7 + $0x60] sm:$0xff]
    %v518 = vld [vmem:[#allocation7 + $0x68] sm:$0xff]
    %v519 = vld [vmem:[#allocation7 + $0x70] sm:$0xff]
    %v520 = vld [vmem:[#allocation7 + $0x78] sm:$0xff]
    %v522 = vlaneseq
    %v523 = vshrl.u32 %v522, 7
    %v524 = vsub.s32 0, %v523
    %v525 = vrot.slane %v81, %v524
    %527 = vmatprep.subr.mxu0 0.0
    %528 = vmatpush1.msra.mxu0 %v505
    %529 = vmatprep.subr.mxu0 0.0
    %530 = vmatpush1.msra.mxu0 %v506
    %531 = vmatprep.subr.mxu0 0.0
    %532 = vmatpush1.msra.mxu0 %v507
    %533 = vmatprep.subr.mxu0 0.0
    %534 = vmatpush1.msra.mxu0 %v508
    %535 = vmatprep.subr.mxu0 0.0
    %536 = vmatpush1.msra.mxu0 %v509
    %537 = vmatprep.subr.mxu0 0.0
    %538 = vmatpush1.msra.mxu0 %v510
    %539 = vmatprep.subr.mxu0 0.0
    %540 = vmatpush1.msra.mxu0 %v511
    %541 = vmatprep.subr.mxu0 0.0
    %542 = vmatpush1.msra.mxu0 %v512
    %543 = vmatprep.subr.mxu0 0.0
    %544 = vmatpush1.msra.mxu0 %v513
    %545 = vmatprep.subr.mxu0 0.0
    %546 = vmatpush1.msra.mxu0 %v514
    %547 = vmatprep.subr.mxu0 0.0
    %548 = vmatpush1.msra.mxu0 %v515
    %549 = vmatprep.subr.mxu0 0.0
    %550 = vmatpush1.msra.mxu0 %v516
    %551 = vmatprep.subr.mxu0 0.0
    %552 = vmatpush1.msra.mxu0 %v517
    %553 = vmatprep.subr.mxu0 0.0
    %554 = vmatpush1.msra.mxu0 %v518
    %555 = vmatprep.subr.mxu0 0.0
    %556 = vmatpush1.msra.mxu0 %v519
    %557 = vmatprep.subr.mxu0 0.0
    %558 = vmatpush1.msra.mxu0 %v520
    %559 = vmatprep.subr.mxu0 0.0
    %560 = vmatpush1.msra.mxu0 0.0
    %561 = vmatprep.subr.mxu0 0.0
    %562 = vmatpush1.msra.mxu0 0.0
    %563 = vmatprep.subr.mxu0 0.0
    %564 = vmatpush1.msra.mxu0 0.0
    %565 = vmatprep.subr.mxu0 0.0
    %566 = vmatpush1.msra.mxu0 0.0
    %567 = vmatprep.subr.mxu0 0.0
    %568 = vmatpush1.msra.mxu0 0.0
    %569 = vmatprep.subr.mxu0 0.0
    %570 = vmatpush1.msra.mxu0 0.0
    %571 = vmatprep.subr.mxu0 0.0
    %572 = vmatpush1.msra.mxu0 0.0
    %573 = vmatprep.subr.mxu0 0.0
    %574 = vmatpush1.msra.mxu0 0.0
    %575 = vmatprep.subr.mxu0 0.0
    %576 = vmatpush1.msra.mxu0 0.0
    %577 = vmatprep.subr.mxu0 0.0
    %578 = vmatpush1.msra.mxu0 0.0
    %579 = vmatprep.subr.mxu0 0.0
    %580 = vmatpush1.msra.mxu0 0.0
    %581 = vmatprep.subr.mxu0 0.0
    %582 = vmatpush1.msra.mxu0 0.0
    %583 = vmatprep.subr.mxu0 0.0
    %584 = vmatpush1.msra.mxu0 0.0
    %585 = vmatprep.subr.mxu0 0.0
    %586 = vmatpush1.msra.mxu0 0.0
    %587 = vmatprep.subr.mxu0 0.0
    %588 = vmatpush1.msra.mxu0 0.0
    %589 = vmatprep.subr.mxu0 0.0
    %590 = vmatpush1.msra.mxu0 0.0
    %591 = vmatprep.mubr.f32.mxu0 0.0
    %592 = vmatmul.mubr.f32.gmra.mrb[0].mxu0 %v502
    %v593 = vpop.f32.mrb[0].mxu0
    %v594 = vadd.f32 %v525, %v593
    %v595 = vpop.f32.mrb[0].mxu0
    %596 = vdwg.mxu0
    %v597 = vmax.f32 %v594, 0.0
    %v598 = vld [vmem:[#allocation8] sm:$0xff]
    %v599 = vld [vmem:[#allocation8 + $0x8] sm:$0xff]
    %v600 = vld [vmem:[#allocation8 + $0x10] sm:$0xff]
    %v601 = vld [vmem:[#allocation8 + $0x18] sm:$0xff]
    %v602 = vld [vmem:[#allocation8 + $0x20] sm:$0xff]
    %v603 = vld [vmem:[#allocation8 + $0x28] sm:$0xff]
    %v604 = vld [vmem:[#allocation8 + $0x30] sm:$0xff]
    %v605 = vld [vmem:[#allocation8 + $0x38] sm:$0xff]
    %v606 = vld [vmem:[#allocation8 + $0x40] sm:$0xff]
    %v607 = vld [vmem:[#allocation8 + $0x48] sm:$0xff]
    %v608 = vld [vmem:[#allocation8 + $0x50] sm:$0xff]
    %v609 = vld [vmem:[#allocation8 + $0x58] sm:$0xff]
    %v610 = vld [vmem:[#allocation8 + $0x60] sm:$0xff]
    %v611 = vld [vmem:[#allocation8 + $0x68] sm:$0xff]
    %v612 = vld [vmem:[#allocation8 + $0x70] sm:$0xff]
    %v613 = vld [vmem:[#allocation8 + $0x78] sm:$0xff]
    %v615 = vlaneseq
    %v616 = vshrl.u32 %v615, 7
    %v617 = vsub.s32 0, %v616
    %v618 = vrot.slane %v82, %v617
    %620 = vmatprep.subr.mxu0 0.0
    %621 = vmatpush1.msra.mxu0 %v598
    %622 = vmatprep.subr.mxu0 0.0
    %623 = vmatpush1.msra.mxu0 %v599
    %624 = vmatprep.subr.mxu0 0.0
    %625 = vmatpush1.msra.mxu0 %v600
    %626 = vmatprep.subr.mxu0 0.0
    %627 = vmatpush1.msra.mxu0 %v601
    %628 = vmatprep.subr.mxu0 0.0
    %629 = vmatpush1.msra.mxu0 %v602
    %630 = vmatprep.subr.mxu0 0.0
    %631 = vmatpush1.msra.mxu0 %v603
    %632 = vmatprep.subr.mxu0 0.0
    %633 = vmatpush1.msra.mxu0 %v604
    %634 = vmatprep.subr.mxu0 0.0
    %635 = vmatpush1.msra.mxu0 %v605
    %636 = vmatprep.subr.mxu0 0.0
    %637 = vmatpush1.msra.mxu0 %v606
    %638 = vmatprep.subr.mxu0 0.0
    %639 = vmatpush1.msra.mxu0 %v607
    %640 = vmatprep.subr.mxu0 0.0
    %641 = vmatpush1.msra.mxu0 %v608
    %642 = vmatprep.subr.mxu0 0.0
    %643 = vmatpush1.msra.mxu0 %v609
    %644 = vmatprep.subr.mxu0 0.0
    %645 = vmatpush1.msra.mxu0 %v610
    %646 = vmatprep.subr.mxu0 0.0
    %647 = vmatpush1.msra.mxu0 %v611
    %648 = vmatprep.subr.mxu0 0.0
    %649 = vmatpush1.msra.mxu0 %v612
    %650 = vmatprep.subr.mxu0 0.0
    %651 = vmatpush1.msra.mxu0 %v613
    %652 = vmatprep.subr.mxu0 0.0
    %653 = vmatpush1.msra.mxu0 0.0
    %654 = vmatprep.subr.mxu0 0.0
    %655 = vmatpush1.msra.mxu0 0.0
    %656 = vmatprep.subr.mxu0 0.0
    %657 = vmatpush1.msra.mxu0 0.0
    %658 = vmatprep.subr.mxu0 0.0
    %659 = vmatpush1.msra.mxu0 0.0
    %660 = vmatprep.subr.mxu0 0.0
    %661 = vmatpush1.msra.mxu0 0.0
    %662 = vmatprep.subr.mxu0 0.0
    %663 = vmatpush1.msra.mxu0 0.0
    %664 = vmatprep.subr.mxu0 0.0
    %665 = vmatpush1.msra.mxu0 0.0
    %666 = vmatprep.subr.mxu0 0.0
    %667 = vmatpush1.msra.mxu0 0.0
    %668 = vmatprep.subr.mxu0 0.0
    %669 = vmatpush1.msra.mxu0 0.0
    %670 = vmatprep.subr.mxu0 0.0
    %671 = vmatpush1.msra.mxu0 0.0
    %672 = vmatprep.subr.mxu0 0.0
    %673 = vmatpush1.msra.mxu0 0.0
    %674 = vmatprep.subr.mxu0 0.0
    %675 = vmatpush1.msra.mxu0 0.0
    %676 = vmatprep.subr.mxu0 0.0
    %677 = vmatpush1.msra.mxu0 0.0
    %678 = vmatprep.subr.mxu0 0.0
    %679 = vmatpush1.msra.mxu0 0.0
    %680 = vmatprep.subr.mxu0 0.0
    %681 = vmatpush1.msra.mxu0 0.0
    %682 = vmatprep.subr.mxu0 0.0
    %683 = vmatpush1.msra.mxu0 0.0
    %684 = vmatprep.mubr.f32.mxu0 0.0
    %685 = vmatmul.mubr.f32.gmra.mrb[0].mxu0 %v597
    %v686 = vpop.f32.mrb[0].mxu0
    %v687 = vadd.f32 %v618, %v686
    %v688 = vpop.f32.mrb[0].mxu0
    %689 = vdwg.mxu0
    %690 = vst [vmem:[#allocation10] sm:$0xff] %v687
    // Predicated region
    $region46: #{tpu_custom_call.1} parent=1 // pred_check
      _
    $region47: #{tpu_custom_call.1} parent=1 // pred_check_branch
      %692 = sbr.rel (0) target = $region49
    $region48: #{tpu_custom_call.1} parent=1 // pred_region
      %s694 = ssub.s32 128, 128
      %695 = vsyncadd [#allocation4], %s694
      %s697 = sshll.u32 [#allocation10], 4
      %s698 = int_to_ptr.vmem [resolvable:$true] %s697
      %700 = dma.vmem_to_hbm [thread:$0]  %s698, 128, %s7, [#allocation4]
    $region49: #{tpu_custom_call.1} parent=1 // pred_fallthru
      _
    // Predicated region
    $region50: #{tpu_custom_call.1} parent=1 // pred_check
      _
    $region51: #{tpu_custom_call.1} parent=1 // pred_check_branch
      %702 = sbr.rel (0) target = $region53
    $region52: #{tpu_custom_call.1} parent=1 // pred_region
      %703 = dma.done [#allocation4], 128
    $region53: #{tpu_custom_call.1} parent=1 // pred_fallthru
      _
    %704 = vsyncpa [#allocation3], 1
    %705 = vsyncpa [#allocation6], 1
    %706 = vsyncpa [#allocation9], 1
    %707 = vsyncpa [#allocation4], 1

</llo_original>
